<compile_context>
chip_gen: v7x
topology: tpu7x:2x2x1
jax: 0.10.0
libtpu: 0.0.40
codegen_flags: <defaults>
</compile_context>

<pallas_src>
import jax
import jax.numpy as jnp
from jax.experimental import pallas as pl
from jax.experimental.pallas import tpu as pltpu


# ---------------------------------------------------------------------------
# Kernel
# ---------------------------------------------------------------------------
def _scaling_kernel(x_ref, shift_ref, inv_ref, o_ref):
    # x_ref: (BR, TS) tile.  shift_ref / inv_ref: (BR, 1) per-row params,
    # broadcast along lanes.  No vector divide: sub + mul only (2 VALU ops/vreg).
    out = (x_ref[...] - shift_ref[...]) * inv_ref[...]
    o_ref[...] = out.astype(o_ref.dtype)


# ---------------------------------------------------------------------------
# Tiling helpers
# ---------------------------------------------------------------------------
def _round_down(x, m):
    return (x // m) * m


def _round_up(x, m):
    return ((x + m - 1) // m) * m


def _sublane_mult(dtype):
    # 8 for f32, 16 for bf16/fp16, 32 for int8/fp8 (packed sublanes).
    return max(8, 32 // jnp.dtype(dtype).itemsize)


def _hw_budget(bytes_per_elem):
    """(vmem_limit_bytes, target block elems) tuned per TPU generation."""
    try:
        vmem = pltpu.get_tpu_info().vmem_capacity_bytes
    except Exception:
        vmem = 64 * 1024 * 1024                      # conservative (v7x-sized)
    if vmem >= 96 * 1024 * 1024:                     # v5e / v6e: 128 MiB physical VMEM
        vmem_limit = 64 * 1024 * 1024
        block_budget_bytes = 8 * 1024 * 1024         # ~8 MiB per in/out block
    else:                                            # v7x: 64 MiB VMEM per TC
        vmem_limit = 48 * 1024 * 1024
        block_budget_bytes = 4 * 1024 * 1024         # ~4 MiB per in/out block
    # footprint ~= 2 (double buffer) * block_elems * (in_bytes + out_bytes)
    target_elems = max(1024, (2 * block_budget_bytes) // bytes_per_elem)
    return vmem_limit, target_elems


def _pick_block_shape(rows, cols, sub_mult, target_elems):
    """Block dims that are multiples of (sub_mult, 128) or full extents."""
    ts_cap = max(128, _round_down(max(target_elems // sub_mult, 128), 128))
    ts = cols if cols <= ts_cap else ts_cap              # full extent or 128-multiple
    br_cap = max(sub_mult, _round_down(max(target_elems // ts, sub_mult), sub_mult))
    br = rows if rows <= br_cap else br_cap               # full extent or sub_mult-multiple
    return br, ts


_MIN_STEPS = 4                 # >= 2 for v7x megacore, with slack for pipelining
_MIN_SPLIT_ELEMS = 128 * 1024  # never split a tile below ~this many elements


def _ensure_min_steps(rows, cols, br, ts, sub_mult):
    """Split blocks until the grid has enough 'parallel' steps (v7x: 2 TCs)."""
    def steps(b, t):
        return pl.cdiv(rows, b) * pl.cdiv(cols, t)

    while steps(br, ts) < _MIN_STEPS and br * ts >= 2 * _MIN_SPLIT_ELEMS:
        if br > sub_mult:
            br = max(sub_mult, _round_down(br // 2, sub_mult))
        elif ts > 128:
            ts = max(128, _round_up(ts // 2, 128))
        else:
            break
    return br, ts


# ---------------------------------------------------------------------------
# Wrapper
# ---------------------------------------------------------------------------
def scaling_layer(x, shift, scale, *, force_pallas=False, min_pallas_elems=64 * 1024):
    """x: (N, C, H, W); shift, scale: (C,). Returns (x - shift) / scale."""
    N, C, H, W = x.shape
    assert shift.shape == (C,) and scale.shape == (C,)

    # Match PyTorch promotion (f32 buffers): bf16 input -> f32 output.
    out_dtype = jnp.result_type(x.dtype, shift.dtype, scale.dtype)
    shift_c = shift.astype(out_dtype)                 # (C,)
    inv_scale = (1.0 / scale).astype(out_dtype)       # (C,) reciprocal, hoisted

    total = N * C * H * W
    if total < min_pallas_elems and not force_pallas:
        # Tiny inputs: pallas_call launch overhead dominates and blocks XLA
        # fusion of a trivially-fusable elementwise op.
        return (x.astype(out_dtype) - shift_c[None, :, None, None]) * \
            inv_scale[None, :, None, None]

    R, S = N * C, H * W
    x2 = x.reshape(R, S)                              # free, contiguous, lane-dense
    shift_rows = jnp.tile(shift_c, N).reshape(R, 1)   # row r -> channel r % C
    inv_rows = jnp.tile(inv_scale, N).reshape(R, 1)

    in_bytes = jnp.dtype(x.dtype).itemsize
    out_bytes = jnp.dtype(out_dtype).itemsize
    vmem_limit, target_elems = _hw_budget(in_bytes + out_bytes)
    sub_mult = max(_sublane_mult(x.dtype), _sublane_mult(out_dtype))

    br, ts = _pick_block_shape(R, S, sub_mult, target_elems)
    br, ts = _ensure_min_steps(R, S, br, ts, sub_mult)

    grid = (pl.cdiv(R, br), pl.cdiv(S, ts))           # cdiv grid: tails are clipped

    out2 = pl.pallas_call(
        _scaling_kernel,
        out_shape=jax.ShapeDtypeStruct((R, S), out_dtype),
        grid=grid,
        in_specs=[
            pl.BlockSpec((br, ts), lambda i, j: (i, j)),
            pl.BlockSpec((br, 1), lambda i, j: (i, 0)),
            pl.BlockSpec((br, 1), lambda i, j: (i, 0)),
        ],
        out_specs=pl.BlockSpec((br, ts), lambda i, j: (i, j)),
        compiler_params=pltpu.CompilerParams(
            dimension_semantics=("parallel", "parallel"),
            vmem_limit_bytes=vmem_limit,
        ),
    )(x2, shift_rows, inv_rows)

    return out2.reshape(N, C, H, W)


# ---------------------------------------------------------------------------
# Self-test
# ---------------------------------------------------------------------------
if __name__ == "__main__":
    # Deterministic buffers (from the module's __init__ — not a checkpoint load).
    shift = jnp.array([-0.030, -0.088, -0.188], dtype=jnp.float32)
    scale = jnp.array([0.458, 0.448, 0.450], dtype=jnp.float32)

    key = jax.random.PRNGKey(0)
    x = jax.random.normal(key, (2, 3, 16, 16), dtype=jnp.float32)  # NCHW

    # Force the Pallas path even though this shape is below the fast-path cutoff.
    out = jax.block_until_ready(scaling_layer(x, shift, scale, force_pallas=True))
    ref = (x - shift[None, :, None, None]) / scale[None, :, None, None]
    assert out.shape == x.shape and out.dtype == ref.dtype
    assert jnp.allclose(out, ref, rtol=1e-6, atol=1e-6)

    # Non-128-divisible spatial extent exercises the full-extent / cdiv tail path.
    x2 = jax.random.normal(jax.random.PRNGKey(1), (2, 3, 20, 20), dtype=jnp.float32)
    out2 = jax.block_until_ready(scaling_layer(x2, shift, scale, force_pallas=True))
    ref2 = (x2 - shift[None, :, None, None]) / scale[None, :, None, None]
    assert jnp.allclose(out2, ref2, rtol=1e-6, atol=1e-6)

    print("KERNEL_OK")
</pallas_src>

<mosaic_0001>
module attributes {stable_mosaic.version = 11 : i64} {
  func.func @_scaling_kernel(%arg0: i32, %arg1: i32, %arg2: memref<6x256xf32, #tpu.memory_space<vmem>>, %arg3: memref<6x1xf32, #tpu.memory_space<vmem>>, %arg4: memref<6x1xf32, #tpu.memory_space<vmem>>, %arg5: memref<6x256xf32, #tpu.memory_space<vmem>>) attributes {dimension_semantics = [#tpu.dimension_semantics<parallel>, #tpu.dimension_semantics<parallel>], iteration_bounds = array<i64: 1, 1>, scalar_prefetch = 0 : i64, scratch_operands = 0 : i64, tpu.core_type = #tpu.core_type<tc>, window_params = [{transform_indices = @transform_0, window_bounds = array<i64: 6, 256>}, {transform_indices = @transform_1, window_bounds = array<i64: 6, 1>}, {transform_indices = @transform_2, window_bounds = array<i64: 6, 1>}, {transform_indices = @transform_3, window_bounds = array<i64: 6, 256>}]} {
    %c0 = arith.constant 0 : index
    %c0_0 = arith.constant 0 : index
    %0 = vector.load %arg2[%c0, %c0_0] : memref<6x256xf32, #tpu.memory_space<vmem>>, vector<6x256xf32>
    %c0_1 = arith.constant 0 : index
    %c0_2 = arith.constant 0 : index
    %1 = vector.load %arg3[%c0_1, %c0_2] : memref<6x1xf32, #tpu.memory_space<vmem>>, vector<6x1xf32>
    %2 = vector.broadcast %1 : vector<6x1xf32> to vector<6x256xf32>
    %3 = arith.subf %0, %2 : vector<6x256xf32>
    %c0_3 = arith.constant 0 : index
    %c0_4 = arith.constant 0 : index
    %4 = vector.load %arg4[%c0_3, %c0_4] : memref<6x1xf32, #tpu.memory_space<vmem>>, vector<6x1xf32>
    %5 = vector.broadcast %4 : vector<6x1xf32> to vector<6x256xf32>
    %6 = arith.mulf %3, %5 : vector<6x256xf32>
    %c0_5 = arith.constant 0 : index
    %c0_6 = arith.constant 0 : index
    %7 = vector.load %arg5[%c0_5, %c0_6] : memref<6x256xf32, #tpu.memory_space<vmem>>, vector<6x256xf32>
    tpu.vector_store %arg5[%c0_5, %c0_6], %6 {strides = array<i32>} : memref<6x256xf32, #tpu.memory_space<vmem>>, vector<6x256xf32>,
    return
  }
  func.func @transform_0(%arg0: i32, %arg1: i32) -> (i32, i32) {
    %c0_i32 = arith.constant 0 : i32
    return %arg0, %arg1 : i32, i32
  }
  func.func @transform_1(%arg0: i32, %arg1: i32) -> (i32, i32) {
    %c0_i32 = arith.constant 0 : i32
    %c0_i32_0 = arith.constant 0 : i32
    return %arg0, %c0_i32 : i32, i32
  }
  func.func @transform_2(%arg0: i32, %arg1: i32) -> (i32, i32) {
    %c0_i32 = arith.constant 0 : i32
    %c0_i32_0 = arith.constant 0 : i32
    return %arg0, %c0_i32 : i32, i32
  }
  func.func @transform_3(%arg0: i32, %arg1: i32) -> (i32, i32) {
    %c0_i32 = arith.constant 0 : i32
    return %arg0, %arg1 : i32, i32
  }
}

</mosaic_0001>

<llo_original>
// kernel: tpu_custom_call.1
$region0: #{tpu_custom_call.1}
  #allocation0 [shape = 'u32[]', space=smem, size = 0x4, offset = 0x4, fixed_abs, tag = 'smem constant byte address 0x4 - core index']
  #allocation1 [shape = 'u32[144,128]{1,0:T(1,128)}', space=vmem, size = 0x12000, scoped, tag = 'internal scratch']
  %s0 = inlined_call_operand.vmem [shape: f32[6,256], index: 0, kind: input, shape index: {}]
  %s1 = inlined_call_operand.vmem [shape: f32[6,1], index: 1, kind: input, shape index: {}]
  %s2 = inlined_call_operand.vmem [shape: f32[6,1], index: 2, kind: input, shape index: {}]
  %s3 = inlined_call_operand.hbm [shape: f32[6,256], index: 3, kind: output, shape index: {}]
  %s4 = sld [smem:[#allocation0]]
  $region22: #{tpu_custom_call.1} parent=0
    _
  %s6 = ssub.s32 1, %s4
  %s7 = scalar_select 0, %s6, %s4
  $region1: #{tpu_custom_call.1} parent=0
    #allocation2 [shape = 'u8[8192]{0}', space=vmem, size = 0x2000, scoped, tag = 'output window, operand 0, single buffered']
    #allocation3 [shape = 's32[1]{0}', space=sflag, size = 0x4, scoped, tag = 'scoped memory for tpu_custom_call.1']
    %8 = vsyncpa [#allocation3], 0
    // Predicated region
    $region2: #{tpu_custom_call.1} parent=1 // pred_check
      _
    $region3: #{tpu_custom_call.1} parent=1 // pred_check_branch
      %10 = sbr.rel (0) target = $region5
    $region4: #{tpu_custom_call.1} parent=1 // pred_region
      _
    $region5: #{tpu_custom_call.1} parent=1 // pred_fallthru
      _
    // Predicated region
    $region6: #{tpu_custom_call.1} parent=1 // pred_check
      _
    $region7: #{tpu_custom_call.1} parent=1 // pred_check_branch
      %12 = sbr.rel (0) target = $region9
    $region8: #{tpu_custom_call.1} parent=1 // pred_region
      _
    $region9: #{tpu_custom_call.1} parent=1 // pred_fallthru
      _
    // Predicated region
    $region10: #{tpu_custom_call.1} parent=1 // pred_check
      _
    $region11: #{tpu_custom_call.1} parent=1 // pred_check_branch
      %14 = sbr.rel (0) target = $region13
    $region12: #{tpu_custom_call.1} parent=1 // pred_region
      _
    $region13: #{tpu_custom_call.1} parent=1 // pred_fallthru
      _
    %v15 = vld [vmem:[%s0] sm:$0x3f]
    %v16 = vld [vmem:[%s0 + $0x8] sm:$0x3f]
    %v17 = vld [vmem:[%s1] sm:$0x3f]
    %19 = vset.pattern.permute.xlu0 0
    %20 = vperm.xlu0 %19, %v17
    %v21 = vpop.permute.xlu0 %20
    %v23 = vsub.f32 %v15, %v21
    %v24 = vsub.f32 %v16, %v21
    %v25 = vld [vmem:[%s2] sm:$0x3f]
    %27 = vset.pattern.permute.xlu0 0
    %28 = vperm.xlu0 %27, %v25
    %v29 = vpop.permute.xlu0 %28
    %v31 = vmul.f32 %v23, %v29
    %v32 = vmul.f32 %v24, %v29
    %33 = vst [vmem:[#allocation2] sm:$0x3f] %v31
    %34 = vst [vmem:[#allocation2 + $0x8] sm:$0x3f] %v32
    // Predicated region
    $region14: #{tpu_custom_call.1} parent=1 // pred_check
      _
    $region15: #{tpu_custom_call.1} parent=1 // pred_check_branch
      %36 = sbr.rel (0) target = $region17
    $region16: #{tpu_custom_call.1} parent=1 // pred_region
      %s38 = ssub.s32 256, 256
      %39 = vsyncadd [#allocation3], %s38
      %s41 = sshll.u32 [#allocation2], 4
      %s42 = int_to_ptr.vmem [resolvable:$true] %s41
      %44 = dma.vmem_to_hbm [thread:$0]  %s42, 256, %s3, [#allocation3]
    $region17: #{tpu_custom_call.1} parent=1 // pred_fallthru
      _
    // Predicated region
    $region18: #{tpu_custom_call.1} parent=1 // pred_check
      _
    $region19: #{tpu_custom_call.1} parent=1 // pred_check_branch
      %46 = sbr.rel (0) target = $region21
    $region20: #{tpu_custom_call.1} parent=1 // pred_region
      %47 = dma.done [#allocation3], 256
    $region21: #{tpu_custom_call.1} parent=1 // pred_fallthru
      _
    %48 = vsyncpa [#allocation3], 1

</llo_original>
